<compile_context>
chip_gen: v6e
topology: v6e:2x2x1
jax: 0.10.0
libtpu: 0.0.40
codegen_flags: <defaults>
</compile_context>

<pallas_src>
import functools
import math

import jax
import jax.numpy as jnp
from jax import lax
from jax.experimental import pallas as pl
from jax.experimental.pallas import tpu as pltpu

# --- synthetic config weights (deterministic) ------------------------------
HM_WEIGHT = 1.0
HM_REG_WEIGHT = 1.0
OFFSET_WEIGHT = 1.0
DEPTH_WEIGHT = 1.0
ROTATE_WEIGHT = 1.0

_SIG_LO = 1e-4
_SIG_HI = 1.0 - 1e-4
_LOG_LO = math.log(_SIG_LO)
_LOG_HI = math.log(_SIG_HI)

_LANES = 512          # lane-dense last dim (multiple of 128)
_MAX_TILE_ROWS = 256  # rows per grid step (multiple of 8)


# ---------------------------------------------------------------------------
# Kernel 1: heatmap losses (focal loss + positive-L1 loss), fused + tiled.
#
# Inputs are the logits / ground-truth flattened to (rows_pad, 512) f32
# (zero padded; validity handled with an in-kernel iota mask).  Per grid step
# the five per-element quantities are added element-wise into a VMEM scratch
# accumulator; the cross-lane reduction to 5 SMEM scalars happens only at the
# last step:
#   [0] sum(pos_loss)  [1] sum(neg_loss)  [2] num_pos (gt==1)
#   [3] sum(|pred - gt| over gt>0)        [4] num(gt>0)
# ---------------------------------------------------------------------------
def _heatmap_loss_kernel(x_ref, g_ref, out_ref, acc_ref, *, n_valid):
    pid = pl.program_id(0)
    tile_r, lanes = x_ref.shape

    @pl.when(pid == 0)
    def _init():
        acc_ref[...] = jnp.zeros_like(acc_ref)

    x = x_ref[...].astype(jnp.float32)
    gt = g_ref[...].astype(jnp.float32)

    # validity mask for the zero padding (exact, no memory traffic)
    row_i = lax.broadcasted_iota(jnp.int32, (tile_r, lanes), 0)
    lane_i = lax.broadcasted_iota(jnp.int32, (tile_r, lanes), 1)
    gidx = (pid * tile_r + row_i) * lanes + lane_i
    valid = (gidx < n_valid).astype(jnp.float32)

    # clamped sigmoid + its logs with only 1 exp + 1 log per element
    e = jnp.exp(-x)
    sig = 1.0 / (1.0 + e)
    pred = jnp.clip(sig, _SIG_LO, _SIG_HI)
    lse = jnp.log(1.0 + e)                       # = -log(sigmoid(x))
    log_p = jnp.where(sig < _SIG_LO, _LOG_LO,
                      jnp.where(sig > _SIG_HI, _LOG_HI, -lse))
    log_1mp = jnp.where(sig < _SIG_LO, _LOG_HI,
                        jnp.where(sig > _SIG_HI, _LOG_LO, -x - lse))

    pos_inds = (gt == 1.0).astype(jnp.float32) * valid
    neg_inds = (gt < 1.0).astype(jnp.float32) * valid
    neg_w = (1.0 - gt) ** 4
    one_m_pred = 1.0 - pred

    pos_loss = log_p * one_m_pred * one_m_pred * pos_inds
    neg_loss = log_1mp * pred * pred * neg_w * neg_inds

    pos_gt = (gt > 0.0).astype(jnp.float32) * valid          # PosL1Loss mask
    l1 = jnp.abs(pred - gt) * pos_gt

    # element-wise accumulation (VPU only); cross-lane reduce deferred
    acc_ref[0] += pos_loss
    acc_ref[1] += neg_loss
    acc_ref[2] += pos_inds
    acc_ref[3] += l1
    acc_ref[4] += pos_gt

    @pl.when(pid == pl.num_programs(0) - 1)
    def _finalize():
        out_ref[0] = jnp.sum(acc_ref[0])
        out_ref[1] = jnp.sum(acc_ref[1])
        out_ref[2] = jnp.sum(acc_ref[2])
        out_ref[3] = jnp.sum(acc_ref[3])
        out_ref[4] = jnp.sum(acc_ref[4])


def heatmap_losses(heatmap_logits, gt_heatmap):
    """Returns (focal_loss, pos_l1_loss). Inputs are NCHW, same shape."""
    n = int(heatmap_logits.size)
    lanes = _LANES
    rows = -(-n // lanes)
    tile_r = min(_MAX_TILE_ROWS, ((rows + 7) // 8) * 8)
    rows_pad = ((rows + tile_r - 1) // tile_r) * tile_r
    n_pad = rows_pad * lanes

    x = jnp.pad(heatmap_logits.reshape(-1).astype(jnp.float32),
                (0, n_pad - n)).reshape(rows_pad, lanes)
    g = jnp.pad(gt_heatmap.reshape(-1).astype(jnp.float32),
                (0, n_pad - n)).reshape(rows_pad, lanes)

    kern = functools.partial(_heatmap_loss_kernel, n_valid=n)
    sums = pl.pallas_call(
        kern,
        out_shape=jax.ShapeDtypeStruct((5,), jnp.float32),
        grid_spec=pltpu.PrefetchScalarGridSpec(
            num_scalar_prefetch=0,
            grid=(rows_pad // tile_r,),
            in_specs=[pl.BlockSpec((tile_r, lanes), lambda i: (i, 0)),
                      pl.BlockSpec((tile_r, lanes), lambda i: (i, 0))],
            out_specs=pl.BlockSpec((5,), lambda i: (0,),
                                   memory_space=pltpu.MemorySpace.SMEM),
            scratch_shapes=[pltpu.VMEM((5, tile_r, lanes), jnp.float32)]),
        compiler_params=pltpu.CompilerParams(
            dimension_semantics=("arbitrary",)),
        cost_estimate=pl.CostEstimate(flops=30 * n_pad,
                                      transcendentals=2 * n_pad,
                                      bytes_accessed=8 * n_pad + 20),
    )(x, g)

    pos_sum, neg_sum, num_pos, l1_sum, num_gt0 = (sums[i] for i in range(5))

    # _neg_loss final combine (branch on num_pos == 0)
    focal = jnp.where(num_pos == 0.0,
                      -neg_sum,
                      -(pos_sum + neg_sum) / jnp.maximum(num_pos, 1.0))
    # PosL1Loss final combine (PyTorch reference divides by num_pos unguarded)
    pos_l1 = l1_sum / num_gt0
    return focal, pos_l1


# ---------------------------------------------------------------------------
# Kernel 2: fused _transpose_and_gather_feat + masked L1 for the three
# regression heads (depth / offset / rotate), which share `ind`.
#
#   feat:   (B, HW, C_total)  NHWC with spatial flattened, C_total = 1+2+8
#   ind, reg_mask, rot_mask: (B, K) int32, scalar-prefetched into SMEM
#   target: (B, K, C_total)
#
# Grid over B; per batch an index-driven gather (fori_loop over K with a
# dynamic sublane slice) accumulates the three masked |pred-target| sums.
# The depth transform 1/(sigmoid(x)+1e-6)-1 is applied to the gathered depth
# values (identical to transforming the full map before gathering).
# Output: 3 SMEM scalars [sum_depth, sum_offset, sum_rotate].
# ---------------------------------------------------------------------------
def _gather_l1_kernel(ind_ref, mreg_ref, mrot_ref, feat_ref, tgt_ref, out_ref,
                      *, c_d, c_o, c_r):
    b = pl.program_id(0)
    hw = feat_ref.shape[1]
    kmax = tgt_ref.shape[1]
    o0, o1 = c_d, c_d + c_o
    r0, r1 = c_d + c_o, c_d + c_o + c_r

    @pl.when(b == 0)
    def _init():
        out_ref[0] = jnp.float32(0.0)
        out_ref[1] = jnp.float32(0.0)
        out_ref[2] = jnp.float32(0.0)

    def body(k, carry):
        acc_d, acc_o, acc_r = carry
        idx = jnp.clip(ind_ref[b, k], 0, hw - 1)          # clamp: OOB is unchecked on TPU
        w_reg = mreg_ref[b, k].astype(jnp.float32)
        w_rot = mrot_ref[b, k].astype(jnp.float32)

        prow = feat_ref[0, pl.ds(idx, 1), :]              # (1, C_total) gathered row
        trow = tgt_ref[0, pl.ds(k, 1), :]                 # (1, C_total)

        d_pred = 1.0 / (1.0 / (1.0 + jnp.exp(-prow[:, 0:c_d])) + 1e-6) - 1.0
        acc_d = acc_d + w_reg * jnp.abs(d_pred - trow[:, 0:c_d])
        acc_o = acc_o + w_rot * jnp.abs(prow[:, o0:o1] - trow[:, o0:o1])
        acc_r = acc_r + w_rot * jnp.abs(prow[:, r0:r1] - trow[:, r0:r1])
        return acc_d, acc_o, acc_r

    init = (jnp.zeros((1, c_d), jnp.float32),
            jnp.zeros((1, c_o), jnp.float32),
            jnp.zeros((1, c_r), jnp.float32))
    acc_d, acc_o, acc_r = lax.fori_loop(0, kmax, body, init)

    out_ref[0] += jnp.sum(acc_d)
    out_ref[1] += jnp.sum(acc_o)
    out_ref[2] += jnp.sum(acc_r)


def fused_gather_l1(depth_map, offset_map, rotate_map,
                    reg_mask, rot_mask, index,
                    tgt_depth, tgt_offset, tgt_rotate):
    b, c_d, h, w = depth_map.shape
    c_o = offset_map.shape[1]
    c_r = rotate_map.shape[1]
    c_total = c_d + c_o + c_r
    k = index.shape[1]
    hw = h * w

    # channel-concat + NCHW -> (B, HW, C) layout plumbing in the wrapper
    feat = jnp.concatenate([depth_map, offset_map, rotate_map], axis=1)
    feat = feat.transpose(0, 2, 3, 1).reshape(b, hw, c_total).astype(jnp.float32)
    tgt = jnp.concatenate([tgt_depth, tgt_offset, tgt_rotate],
                          axis=2).astype(jnp.float32)

    kern = functools.partial(_gather_l1_kernel, c_d=c_d, c_o=c_o, c_r=c_r)
    sums = pl.pallas_call(
        kern,
        out_shape=jax.ShapeDtypeStruct((3,), jnp.float32),
        grid_spec=pltpu.PrefetchScalarGridSpec(
            num_scalar_prefetch=3,
            grid=(b,),
            in_specs=[
                pl.BlockSpec((1, hw, c_total), lambda i, ind, mr, mo: (i, 0, 0)),
                pl.BlockSpec((1, k, c_total), lambda i, ind, mr, mo: (i, 0, 0)),
            ],
            out_specs=pl.BlockSpec((3,), lambda i, ind, mr, mo: (0,),
                                   memory_space=pltpu.MemorySpace.SMEM)),
        compiler_params=pltpu.CompilerParams(
            dimension_semantics=("arbitrary",)),
        cost_estimate=pl.CostEstimate(flops=8 * b * k * c_total,
                                      transcendentals=b * k,
                                      bytes_accessed=4 * b * (hw + k) * c_total),
    )(index.astype(jnp.int32), reg_mask.astype(jnp.int32),
      rot_mask.astype(jnp.int32), feat, tgt)

    # F.l1_loss(..., reduction='mean') divides by the full element count B*K*C
    denom = jnp.float32(b * k)
    loss_depth = sums[0] / (denom * c_d)
    loss_offset = sums[1] / (denom * c_o)
    loss_rotate = sums[2] / (denom * c_r)
    return loss_depth, loss_offset, loss_rotate


# ---------------------------------------------------------------------------
# CarLoss.forward
# ---------------------------------------------------------------------------
def car_loss(outputs, data):
    num_stacks = len(outputs)
    loss_heatmap = jnp.float32(0.0)
    loss_heatmap_reg = jnp.float32(0.0)
    loss_depth = jnp.float32(0.0)
    loss_offset = jnp.float32(0.0)
    loss_rotate = jnp.float32(0.0)

    for s in range(num_stacks):
        out = outputs[s]
        focal, hm_reg = heatmap_losses(out['heatmap'], data['heatmap'])
        d, o, r = fused_gather_l1(out['depth'], out['offset'], out['rotate'],
                                  data['reg_mask'], data['rot_mask'],
                                  data['index'],
                                  data['depth'], data['offset'], data['rotate'])
        loss_heatmap += focal / num_stacks
        loss_heatmap_reg += hm_reg / num_stacks
        loss_depth += d / num_stacks
        loss_offset += o / num_stacks
        loss_rotate += r / num_stacks

    loss = (HM_WEIGHT * loss_heatmap + HM_REG_WEIGHT * loss_heatmap_reg +
            OFFSET_WEIGHT * loss_offset + DEPTH_WEIGHT * loss_depth +
            ROTATE_WEIGHT * loss_rotate)
    loss_stats = {'loss': loss,
                  'loss_heatmap': loss_heatmap,
                  'loss_heatmap_reg': loss_heatmap_reg,
                  'loss_offset': loss_offset,
                  'loss_depth': loss_depth,
                  'loss_rotate': loss_rotate}
    return loss, loss_stats


if __name__ == "__main__":
    key = jax.random.PRNGKey(0)
    ks = jax.random.split(key, 10)

    B, C_HM, H, W, K = 2, 1, 16, 16, 8
    C_OFF, C_ROT = 2, 8

    outputs = [{
        'heatmap': jax.random.normal(ks[0], (B, C_HM, H, W), jnp.float32),
        'depth':   jax.random.normal(ks[1], (B, 1, H, W), jnp.float32),
        'offset':  jax.random.normal(ks[2], (B, C_OFF, H, W), jnp.float32),
        'rotate':  jax.random.normal(ks[3], (B, C_ROT, H, W), jnp.float32),
    }]

    gt_hm = jnp.clip(jax.random.uniform(ks[4], (B, C_HM, H, W), jnp.float32),
                     0.0, 0.95)
    gt_hm = gt_hm.at[0, 0, 3, 5].set(1.0).at[1, 0, 7, 2].set(1.0)

    data = {
        'heatmap': gt_hm,
        'reg_mask': jnp.array([[1, 1, 1, 1, 0, 0, 0, 0],
                               [1, 1, 0, 0, 0, 0, 0, 0]], jnp.int32),
        'rot_mask': jnp.array([[1, 1, 1, 0, 0, 0, 0, 0],
                               [1, 0, 0, 0, 0, 0, 0, 0]], jnp.int32),
        'index': jax.random.randint(ks[5], (B, K), 0, H * W, jnp.int32),
        'depth': jax.random.uniform(ks[6], (B, K, 1), jnp.float32, 1.0, 50.0),
        'offset': jax.random.uniform(ks[7], (B, K, C_OFF), jnp.float32),
        'rotate': jax.random.normal(ks[8], (B, K, C_ROT), jnp.float32),
    }

    loss, stats = car_loss(outputs, data)
    jax.block_until_ready(loss)
    print("KERNEL_OK")
</pallas_src>

<mosaic_0001>
module attributes {stable_mosaic.version = 11 : i64} {
  func.func @_heatmap_loss_kernel(%arg0: i32, %arg1: memref<8x512xf32, #tpu.memory_space<vmem>>, %arg2: memref<8x512xf32, #tpu.memory_space<vmem>>, %arg3: memref<5xf32, #tpu.memory_space<smem>>, %arg4: memref<5x8x512xf32, #tpu.memory_space<vmem>>) attributes {dimension_semantics = [#tpu.dimension_semantics<arbitrary>], iteration_bounds = array<i64: 1>, scalar_prefetch = 0 : i64, scratch_operands = 1 : i64, tpu.core_type = #tpu.core_type<tc>, window_params = [{transform_indices = @transform_0, window_bounds = array<i64: 8, 512>}, {transform_indices = @transform_1, window_bounds = array<i64: 8, 512>}, {transform_indices = @transform_2, window_bounds = array<i64: 5>}]} {
    %c0_i32 = arith.constant 0 : i32
    %0 = arith.cmpi eq, %arg0, %c0_i32 : i32
    %1 = arith.extui %0 : i1 to i32
    %c0_i32_0 = arith.constant 0 : i32
    %2 = arith.cmpi ne, %1, %c0_i32_0 : i32
    scf.if %2 {
      %cst_53 = arith.constant 0.000000e+00 : f32
      %116 = vector.broadcast %cst_53 : f32 to vector<5x8x512xf32>
      %c0_54 = arith.constant 0 : index
      %c0_55 = arith.constant 0 : index
      %c0_56 = arith.constant 0 : index
      %117 = vector.load %arg4[%c0_54, %c0_55, %c0_56] : memref<5x8x512xf32, #tpu.memory_space<vmem>>, vector<5x8x512xf32>
      tpu.vector_store %arg4[%c0_54, %c0_55, %c0_56], %116 {strides = array<i32>} : memref<5x8x512xf32, #tpu.memory_space<vmem>>, vector<5x8x512xf32>,
    } else {
    }
    %c0 = arith.constant 0 : index
    %c0_1 = arith.constant 0 : index
    %3 = vector.load %arg1[%c0, %c0_1] : memref<8x512xf32, #tpu.memory_space<vmem>>, vector<8x512xf32>
    %c0_2 = arith.constant 0 : index
    %c0_3 = arith.constant 0 : index
    %4 = vector.load %arg2[%c0_2, %c0_3] : memref<8x512xf32, #tpu.memory_space<vmem>>, vector<8x512xf32>
    %5 = tpu.iota {dimensions = array<i32: 0>} : vector<8x512xi32>
    %6 = tpu.iota {dimensions = array<i32: 1>} : vector<8x512xi32>
    %c8_i32 = arith.constant 8 : i32
    %7 = arith.muli %arg0, %c8_i32 : i32
    %8 = vector.broadcast %7 : i32 to vector<8x512xi32>
    %9 = arith.addi %8, %5 : vector<8x512xi32>
    %c512_i32 = arith.constant 512 : i32
    %10 = vector.broadcast %c512_i32 : i32 to vector<8x512xi32>
    %11 = arith.muli %9, %10 : vector<8x512xi32>
    %12 = arith.addi %11, %6 : vector<8x512xi32>
    %c512_i32_4 = arith.constant 512 : i32
    %13 = vector.broadcast %c512_i32_4 : i32 to vector<8x512xi32>
    %14 = arith.cmpi slt, %12, %13 : vector<8x512xi32>
    %15 = arith.extui %14 : vector<8x512xi1> to vector<8x512xi32>
    %16 = arith.sitofp %15 : vector<8x512xi32> to vector<8x512xf32>
    %cst = arith.constant 0.000000e+00 : f32
    %17 = vector.broadcast %cst : f32 to vector<8x512xf32>
    %18 = arith.subf %17, %3 : vector<8x512xf32>
    %19 = math.exp %18 : vector<8x512xf32>
    %cst_5 = arith.constant 1.000000e+00 : f32
    %20 = vector.broadcast %cst_5 : f32 to vector<8x512xf32>
    %21 = arith.addf %20, %19 : vector<8x512xf32>
    %cst_6 = arith.constant 1.000000e+00 : f32
    %22 = vector.broadcast %cst_6 : f32 to vector<8x512xf32>
    %23 = arith.divf %22, %21 : vector<8x512xf32>
    %cst_7 = arith.constant 9.99999974E-5 : f32
    %cst_8 = arith.constant 0.999899983 : f32
    %24 = vector.broadcast %cst_7 : f32 to vector<8x512xf32>
    %25 = arith.maximumf %24, %23 : vector<8x512xf32>
    %26 = vector.broadcast %cst_8 : f32 to vector<8x512xf32>
    %27 = arith.minimumf %26, %25 : vector<8x512xf32>
    %cst_9 = arith.constant 1.000000e+00 : f32
    %28 = vector.broadcast %cst_9 : f32 to vector<8x512xf32>
    %29 = arith.addf %28, %19 : vector<8x512xf32>
    %30 = math.log %29 : vector<8x512xf32>
    %cst_10 = arith.constant 9.99999974E-5 : f32
    %31 = vector.broadcast %cst_10 : f32 to vector<8x512xf32>
    %32 = arith.cmpf olt, %23, %31 : vector<8x512xf32>
    %cst_11 = arith.constant 0.999899983 : f32
    %33 = vector.broadcast %cst_11 : f32 to vector<8x512xf32>
    %34 = arith.cmpf ogt, %23, %33 : vector<8x512xf32>
    %cst_12 = arith.constant 0.000000e+00 : f32
    %35 = vector.broadcast %cst_12 : f32 to vector<8x512xf32>
    %36 = arith.subf %35, %30 : vector<8x512xf32>
    %cst_13 = arith.constant -1.000050e-04 : f32
    %37 = vector.broadcast %cst_13 : f32 to vector<8x512xf32>
    %38 = arith.select %34, %37, %36 : vector<8x512xi1>, vector<8x512xf32>
    %cst_14 = arith.constant -9.21034049 : f32
    %39 = vector.broadcast %cst_14 : f32 to vector<8x512xf32>
    %40 = arith.select %32, %39, %38 : vector<8x512xi1>, vector<8x512xf32>
    %cst_15 = arith.constant 9.99999974E-5 : f32
    %41 = vector.broadcast %cst_15 : f32 to vector<8x512xf32>
    %42 = arith.cmpf olt, %23, %41 : vector<8x512xf32>
    %cst_16 = arith.constant 0.999899983 : f32
    %43 = vector.broadcast %cst_16 : f32 to vector<8x512xf32>
    %44 = arith.cmpf ogt, %23, %43 : vector<8x512xf32>
    %cst_17 = arith.constant 0.000000e+00 : f32
    %45 = vector.broadcast %cst_17 : f32 to vector<8x512xf32>
    %46 = arith.subf %45, %3 : vector<8x512xf32>
    %47 = arith.subf %46, %30 : vector<8x512xf32>
    %cst_18 = arith.constant -9.21034049 : f32
    %48 = vector.broadcast %cst_18 : f32 to vector<8x512xf32>
    %49 = arith.select %44, %48, %47 : vector<8x512xi1>, vector<8x512xf32>
    %cst_19 = arith.constant -1.000050e-04 : f32
    %50 = vector.broadcast %cst_19 : f32 to vector<8x512xf32>
    %51 = arith.select %42, %50, %49 : vector<8x512xi1>, vector<8x512xf32>
    %cst_20 = arith.constant 1.000000e+00 : f32
    %52 = vector.broadcast %cst_20 : f32 to vector<8x512xf32>
    %53 = arith.cmpf oeq, %4, %52 : vector<8x512xf32>
    %54 = arith.extui %53 : vector<8x512xi1> to vector<8x512xi32>
    %55 = arith.sitofp %54 : vector<8x512xi32> to vector<8x512xf32>
    %56 = arith.mulf %55, %16 : vector<8x512xf32>
    %cst_21 = arith.constant 1.000000e+00 : f32
    %57 = vector.broadcast %cst_21 : f32 to vector<8x512xf32>
    %58 = arith.cmpf olt, %4, %57 : vector<8x512xf32>
    %59 = arith.extui %58 : vector<8x512xi1> to vector<8x512xi32>
    %60 = arith.sitofp %59 : vector<8x512xi32> to vector<8x512xf32>
    %61 = arith.mulf %60, %16 : vector<8x512xf32>
    %cst_22 = arith.constant 1.000000e+00 : f32
    %62 = vector.broadcast %cst_22 : f32 to vector<8x512xf32>
    %63 = arith.subf %62, %4 : vector<8x512xf32>
    %64 = arith.mulf %63, %63 : vector<8x512xf32>
    %65 = arith.mulf %64, %64 : vector<8x512xf32>
    %cst_23 = arith.constant 1.000000e+00 : f32
    %66 = vector.broadcast %cst_23 : f32 to vector<8x512xf32>
    %67 = arith.subf %66, %27 : vector<8x512xf32>
    %68 = arith.mulf %40, %67 : vector<8x512xf32>
    %69 = arith.mulf %68, %67 : vector<8x512xf32>
    %70 = arith.mulf %69, %56 : vector<8x512xf32>
    %71 = arith.mulf %51, %27 : vector<8x512xf32>
    %72 = arith.mulf %71, %27 : vector<8x512xf32>
    %73 = arith.mulf %72, %65 : vector<8x512xf32>
    %74 = arith.mulf %73, %61 : vector<8x512xf32>
    %cst_24 = arith.constant 0.000000e+00 : f32
    %75 = vector.broadcast %cst_24 : f32 to vector<8x512xf32>
    %76 = arith.cmpf ogt, %4, %75 : vector<8x512xf32>
    %77 = arith.extui %76 : vector<8x512xi1> to vector<8x512xi32>
    %78 = arith.sitofp %77 : vector<8x512xi32> to vector<8x512xf32>
    %79 = arith.mulf %78, %16 : vector<8x512xf32>
    %80 = arith.subf %27, %4 : vector<8x512xf32>
    %81 = math.absf %80 : vector<8x512xf32>
    %82 = arith.mulf %81, %79 : vector<8x512xf32>
    %c0_25 = arith.constant 0 : index
    %c0_26 = arith.constant 0 : index
    %c0_27 = arith.constant 0 : index
    %83 = vector.load %arg4[%c0_25, %c0_26, %c0_27] : memref<5x8x512xf32, #tpu.memory_space<vmem>>, vector<1x8x512xf32>
    %84 = vector.shape_cast %83 : vector<1x8x512xf32> to vector<8x512xf32>
    %85 = arith.addf %84, %70 : vector<8x512xf32>
    %c0_28 = arith.constant 0 : index
    %c0_29 = arith.constant 0 : index
    %c0_30 = arith.constant 0 : index
    %86 = vector.load %arg4[%c0_28, %c0_29, %c0_30] : memref<5x8x512xf32, #tpu.memory_space<vmem>>, vector<1x8x512xf32>
    %87 = vector.shape_cast %86 : vector<1x8x512xf32> to vector<8x512xf32>
    %88 = vector.shape_cast %85 : vector<8x512xf32> to vector<1x8x512xf32>
    tpu.vector_store %arg4[%c0_28, %c0_29, %c0_30], %88 {strides = array<i32>} : memref<5x8x512xf32, #tpu.memory_space<vmem>>, vector<1x8x512xf32>,
    %c1 = arith.constant 1 : index
    %c0_31 = arith.constant 0 : index
    %c0_32 = arith.constant 0 : index
    %89 = vector.load %arg4[%c1, %c0_31, %c0_32] : memref<5x8x512xf32, #tpu.memory_space<vmem>>, vector<1x8x512xf32>
    %90 = vector.shape_cast %89 : vector<1x8x512xf32> to vector<8x512xf32>
    %91 = arith.addf %90, %74 : vector<8x512xf32>
    %c1_33 = arith.constant 1 : index
    %c0_34 = arith.constant 0 : index
    %c0_35 = arith.constant 0 : index
    %92 = vector.load %arg4[%c1_33, %c0_34, %c0_35] : memref<5x8x512xf32, #tpu.memory_space<vmem>>, vector<1x8x512xf32>
    %93 = vector.shape_cast %92 : vector<1x8x512xf32> to vector<8x512xf32>
    %94 = vector.shape_cast %91 : vector<8x512xf32> to vector<1x8x512xf32>
    tpu.vector_store %arg4[%c1_33, %c0_34, %c0_35], %94 {strides = array<i32>} : memref<5x8x512xf32, #tpu.memory_space<vmem>>, vector<1x8x512xf32>,
    %c2 = arith.constant 2 : index
    %c0_36 = arith.constant 0 : index
    %c0_37 = arith.constant 0 : index
    %95 = vector.load %arg4[%c2, %c0_36, %c0_37] : memref<5x8x512xf32, #tpu.memory_space<vmem>>, vector<1x8x512xf32>
    %96 = vector.shape_cast %95 : vector<1x8x512xf32> to vector<8x512xf32>
    %97 = arith.addf %96, %56 : vector<8x512xf32>
    %c2_38 = arith.constant 2 : index
    %c0_39 = arith.constant 0 : index
    %c0_40 = arith.constant 0 : index
    %98 = vector.load %arg4[%c2_38, %c0_39, %c0_40] : memref<5x8x512xf32, #tpu.memory_space<vmem>>, vector<1x8x512xf32>
    %99 = vector.shape_cast %98 : vector<1x8x512xf32> to vector<8x512xf32>
    %100 = vector.shape_cast %97 : vector<8x512xf32> to vector<1x8x512xf32>
    tpu.vector_store %arg4[%c2_38, %c0_39, %c0_40], %100 {strides = array<i32>} : memref<5x8x512xf32, #tpu.memory_space<vmem>>, vector<1x8x512xf32>,
    %c3 = arith.constant 3 : index
    %c0_41 = arith.constant 0 : index
    %c0_42 = arith.constant 0 : index
    %101 = vector.load %arg4[%c3, %c0_41, %c0_42] : memref<5x8x512xf32, #tpu.memory_space<vmem>>, vector<1x8x512xf32>
    %102 = vector.shape_cast %101 : vector<1x8x512xf32> to vector<8x512xf32>
    %103 = arith.addf %102, %82 : vector<8x512xf32>
    %c3_43 = arith.constant 3 : index
    %c0_44 = arith.constant 0 : index
    %c0_45 = arith.constant 0 : index
    %104 = vector.load %arg4[%c3_43, %c0_44, %c0_45] : memref<5x8x512xf32, #tpu.memory_space<vmem>>, vector<1x8x512xf32>
    %105 = vector.shape_cast %104 : vector<1x8x512xf32> to vector<8x512xf32>
    %106 = vector.shape_cast %103 : vector<8x512xf32> to vector<1x8x512xf32>
    tpu.vector_store %arg4[%c3_43, %c0_44, %c0_45], %106 {strides = array<i32>} : memref<5x8x512xf32, #tpu.memory_space<vmem>>, vector<1x8x512xf32>,
    %c4 = arith.constant 4 : index
    %c0_46 = arith.constant 0 : index
    %c0_47 = arith.constant 0 : index
    %107 = vector.load %arg4[%c4, %c0_46, %c0_47] : memref<5x8x512xf32, #tpu.memory_space<vmem>>, vector<1x8x512xf32>
    %108 = vector.shape_cast %107 : vector<1x8x512xf32> to vector<8x512xf32>
    %109 = arith.addf %108, %79 : vector<8x512xf32>
    %c4_48 = arith.constant 4 : index
    %c0_49 = arith.constant 0 : index
    %c0_50 = arith.constant 0 : index
    %110 = vector.load %arg4[%c4_48, %c0_49, %c0_50] : memref<5x8x512xf32, #tpu.memory_space<vmem>>, vector<1x8x512xf32>
    %111 = vector.shape_cast %110 : vector<1x8x512xf32> to vector<8x512xf32>
    %112 = vector.shape_cast %109 : vector<8x512xf32> to vector<1x8x512xf32>
    tpu.vector_store %arg4[%c4_48, %c0_49, %c0_50], %112 {strides = array<i32>} : memref<5x8x512xf32, #tpu.memory_space<vmem>>, vector<1x8x512xf32>,
    %c0_i32_51 = arith.constant 0 : i32
    %113 = arith.cmpi eq, %arg0, %c0_i32_51 : i32
    %114 = arith.extui %113 : i1 to i32
    %c0_i32_52 = arith.constant 0 : i32
    %115 = arith.cmpi ne, %114, %c0_i32_52 : i32
    scf.if %115 {
      %c0_53 = arith.constant 0 : index
      %c0_54 = arith.constant 0 : index
      %c0_55 = arith.constant 0 : index
      %116 = vector.load %arg4[%c0_53, %c0_54, %c0_55] : memref<5x8x512xf32, #tpu.memory_space<vmem>>, vector<1x8x512xf32>
      %117 = vector.shape_cast %116 : vector<1x8x512xf32> to vector<8x512xf32>
      %118 = vector.shape_cast %117 : vector<8x512xf32> to vector<1x8x512xf32>
      %cst_56 = arith.constant dense<0.000000e+00> : vector<1xf32>
      %119 = vector.multi_reduction <add>, %118, %cst_56 [1, 2] : vector<1x8x512xf32> to vector<1xf32>
      %120 = vector.shape_cast %119 : vector<1xf32> to vector<1x1x1xf32>
      %121 = vector.extract %120[0, 0, 0] : f32 from vector<1x1x1xf32>
      %c0_57 = arith.constant 0 : index
      %122 = memref.load %arg3[%c0_57] : memref<5xf32, #tpu.memory_space<smem>>
      memref.store %121, %arg3[%c0_57] : memref<5xf32, #tpu.memory_space<smem>>
      %c1_58 = arith.constant 1 : index
      %c0_59 = arith.constant 0 : index
      %c0_60 = arith.constant 0 : index
      %123 = vector.load %arg4[%c1_58, %c0_59, %c0_60] : memref<5x8x512xf32, #tpu.memory_space<vmem>>, vector<1x8x512xf32>
      %124 = vector.shape_cast %123 : vector<1x8x512xf32> to vector<8x512xf32>
      %125 = vector.shape_cast %124 : vector<8x512xf32> to vector<1x8x512xf32>
      %cst_61 = arith.constant dense<0.000000e+00> : vector<1xf32>
      %126 = vector.multi_reduction <add>, %125, %cst_61 [1, 2] : vector<1x8x512xf32> to vector<1xf32>
      %127 = vector.shape_cast %126 : vector<1xf32> to vector<1x1x1xf32>
      %128 = vector.extract %127[0, 0, 0] : f32 from vector<1x1x1xf32>
      %c1_62 = arith.constant 1 : index
      %129 = memref.load %arg3[%c1_62] : memref<5xf32, #tpu.memory_space<smem>>
      memref.store %128, %arg3[%c1_62] : memref<5xf32, #tpu.memory_space<smem>>
      %c2_63 = arith.constant 2 : index
      %c0_64 = arith.constant 0 : index
      %c0_65 = arith.constant 0 : index
      %130 = vector.load %arg4[%c2_63, %c0_64, %c0_65] : memref<5x8x512xf32, #tpu.memory_space<vmem>>, vector<1x8x512xf32>
      %131 = vector.shape_cast %130 : vector<1x8x512xf32> to vector<8x512xf32>
      %132 = vector.shape_cast %131 : vector<8x512xf32> to vector<1x8x512xf32>
      %cst_66 = arith.constant dense<0.000000e+00> : vector<1xf32>
      %133 = vector.multi_reduction <add>, %132, %cst_66 [1, 2] : vector<1x8x512xf32> to vector<1xf32>
      %134 = vector.shape_cast %133 : vector<1xf32> to vector<1x1x1xf32>
      %135 = vector.extract %134[0, 0, 0] : f32 from vector<1x1x1xf32>
      %c2_67 = arith.constant 2 : index
      %136 = memref.load %arg3[%c2_67] : memref<5xf32, #tpu.memory_space<smem>>
      memref.store %135, %arg3[%c2_67] : memref<5xf32, #tpu.memory_space<smem>>
      %c3_68 = arith.constant 3 : index
      %c0_69 = arith.constant 0 : index
      %c0_70 = arith.constant 0 : index
      %137 = vector.load %arg4[%c3_68, %c0_69, %c0_70] : memref<5x8x512xf32, #tpu.memory_space<vmem>>, vector<1x8x512xf32>
      %138 = vector.shape_cast %137 : vector<1x8x512xf32> to vector<8x512xf32>
      %139 = vector.shape_cast %138 : vector<8x512xf32> to vector<1x8x512xf32>
      %cst_71 = arith.constant dense<0.000000e+00> : vector<1xf32>
      %140 = vector.multi_reduction <add>, %139, %cst_71 [1, 2] : vector<1x8x512xf32> to vector<1xf32>
      %141 = vector.shape_cast %140 : vector<1xf32> to vector<1x1x1xf32>
      %142 = vector.extract %141[0, 0, 0] : f32 from vector<1x1x1xf32>
      %c3_72 = arith.constant 3 : index
      %143 = memref.load %arg3[%c3_72] : memref<5xf32, #tpu.memory_space<smem>>
      memref.store %142, %arg3[%c3_72] : memref<5xf32, #tpu.memory_space<smem>>
      %c4_73 = arith.constant 4 : index
      %c0_74 = arith.constant 0 : index
      %c0_75 = arith.constant 0 : index
      %144 = vector.load %arg4[%c4_73, %c0_74, %c0_75] : memref<5x8x512xf32, #tpu.memory_space<vmem>>, vector<1x8x512xf32>
      %145 = vector.shape_cast %144 : vector<1x8x512xf32> to vector<8x512xf32>
      %146 = vector.shape_cast %145 : vector<8x512xf32> to vector<1x8x512xf32>
      %cst_76 = arith.constant dense<0.000000e+00> : vector<1xf32>
      %147 = vector.multi_reduction <add>, %146, %cst_76 [1, 2] : vector<1x8x512xf32> to vector<1xf32>
      %148 = vector.shape_cast %147 : vector<1xf32> to vector<1x1x1xf32>
      %149 = vector.extract %148[0, 0, 0] : f32 from vector<1x1x1xf32>
      %c4_77 = arith.constant 4 : index
      %150 = memref.load %arg3[%c4_77] : memref<5xf32, #tpu.memory_space<smem>>
      memref.store %149, %arg3[%c4_77] : memref<5xf32, #tpu.memory_space<smem>>
    } else {
    }
    return
  }
  func.func @transform_0(%arg0: i32) -> (i32, i32) {
    %c0_i32 = arith.constant 0 : i32
    %c0_i32_0 = arith.constant 0 : i32
    return %arg0, %c0_i32 : i32, i32
  }
  func.func @transform_1(%arg0: i32) -> (i32, i32) {
    %c0_i32 = arith.constant 0 : i32
    %c0_i32_0 = arith.constant 0 : i32
    return %arg0, %c0_i32 : i32, i32
  }
  func.func @transform_2(%arg0: i32) -> i32 {
    %c0_i32 = arith.constant 0 : i32
    %c0_i32_0 = arith.constant 0 : i32
    return %c0_i32 : i32
  }
}

</mosaic_0001>

<llo_original>
// kernel: tpu_custom_call.1
$region0: #{tpu_custom_call.1}
  #allocation0 [shape = 'u32[]', space=smem, size = 0x4, offset = 0x4, fixed_abs, tag = 'smem constant byte address 0x4 - core index']
  #allocation1 [shape = 'u32[144,128]{1,0:T(1,128)}', space=vmem, size = 0x12000, scoped, tag = 'internal scratch']
  #allocation2 [shape = 'f32[5,8,512]{2,1,0:T(8,128)}', space=vmem, size = 0x14000, scoped, tag = 'scratch operand']
  %s0 = inlined_call_operand.hbm [shape: f32[8,512], index: 0, kind: input, shape index: {}]
  %s1 = inlined_call_operand.hbm [shape: f32[8,512], index: 1, kind: input, shape index: {}]
  %s2 = inlined_call_operand.hbm [shape: f32[5], index: 2, kind: output, shape index: {}]
  %s3 = sld [smem:[#allocation0]]
  $region34: #{tpu_custom_call.1} parent=0
    _
  %s5 = ssub.s32 1, %s3
  %s6 = scalar_select 0, %s5, %s3
  $region1: #{tpu_custom_call.1} parent=0
    #allocation3 [shape = 'u8[16384]{0}', space=vmem, size = 0x4000, scoped, tag = 'input window, operand 0, single buffered']
    #allocation4 [shape = 's32[1]{0}', space=sflag, size = 0x4, scoped, tag = 'scoped memory for tpu_custom_call.1']
    #allocation5 [shape = 's32[1]{0}', space=sflag, size = 0x4, scoped, tag = 'scoped memory for tpu_custom_call.1']
    #allocation6 [shape = 'u8[16384]{0}', space=vmem, size = 0x4000, scoped, tag = 'input window, operand 1, single buffered']
    #allocation7 [shape = 's32[1]{0}', space=sflag, size = 0x4, scoped, tag = 'scoped memory for tpu_custom_call.1']
    #allocation8 [shape = 'u8[512]{0}', space=smem, size = 0x200, scoped, tag = 'output window, operand 0, single buffered']
    %7 = vsyncpa [#allocation4], 0
    %8 = vsyncpa [#allocation7], 0
    %9 = vsyncpa [#allocation5], 0
    // Predicated region
    $region2: #{tpu_custom_call.1} parent=1 // pred_check
      _
    $region3: #{tpu_custom_call.1} parent=1 // pred_check_branch
      %11 = sbr.rel (0) target = $region5
    $region4: #{tpu_custom_call.1} parent=1 // pred_region
      %s13 = ssub.s32 512, 512
      %14 = vsyncadd [#allocation4], %s13
      %s16 = sshll.u32 [#allocation3], 4
      %s17 = int_to_ptr.vmem [resolvable:$true] %s16
      %19 = dma.hbm_to_vmem [thread:$0]  %s0, 512, %s17, [#allocation4]
    $region5: #{tpu_custom_call.1} parent=1 // pred_fallthru
      _
    // Predicated region
    $region6: #{tpu_custom_call.1} parent=1 // pred_check
      _
    $region7: #{tpu_custom_call.1} parent=1 // pred_check_branch
      %21 = sbr.rel (0) target = $region9
    $region8: #{tpu_custom_call.1} parent=1 // pred_region
      %s23 = ssub.s32 512, 512
      %24 = vsyncadd [#allocation7], %s23
      %s26 = sshll.u32 [#allocation6], 4
      %s27 = int_to_ptr.vmem [resolvable:$true] %s26
      %29 = dma.hbm_to_vmem [thread:$0]  %s1, 512, %s27, [#allocation7]
    $region9: #{tpu_custom_call.1} parent=1 // pred_fallthru
      _
    // Predicated region
    $region10: #{tpu_custom_call.1} parent=1 // pred_check
      _
    $region11: #{tpu_custom_call.1} parent=1 // pred_check_branch
      %31 = sbr.rel (0) target = $region13
    $region12: #{tpu_custom_call.1} parent=1 // pred_region
      %32 = dma.done [#allocation4], 512
    $region13: #{tpu_custom_call.1} parent=1 // pred_fallthru
      _
    // Predicated region
    $region14: #{tpu_custom_call.1} parent=1 // pred_check
      _
    $region15: #{tpu_custom_call.1} parent=1 // pred_check_branch
      %34 = sbr.rel (0) target = $region17
    $region16: #{tpu_custom_call.1} parent=1 // pred_region
      %35 = dma.done [#allocation7], 512
    $region17: #{tpu_custom_call.1} parent=1 // pred_fallthru
      _
    %p36 = scmp.eq.s32.totalorder 0, 0
    // Predicated region
    $region18: #{tpu_custom_call.1} parent=1 // pred_check
      %p37 = pneg %p36
    $region19: #{tpu_custom_call.1} parent=1 // pred_check_branch
      %39 = sbr.rel (%p37) target = $region21
    $region20: #{tpu_custom_call.1} parent=1 // pred_region
      %40 = vst [vmem:[#allocation2] sm:$0xff] 0.0
      %41 = vst [vmem:[#allocation2 + $0x8] sm:$0xff] 0.0
      %42 = vst [vmem:[#allocation2 + $0x10] sm:$0xff] 0.0
      %43 = vst [vmem:[#allocation2 + $0x18] sm:$0xff] 0.0
      %44 = vst [vmem:[#allocation2 + $0x20] sm:$0xff] 0.0
      %45 = vst [vmem:[#allocation2 + $0x28] sm:$0xff] 0.0
      %46 = vst [vmem:[#allocation2 + $0x30] sm:$0xff] 0.0
      %47 = vst [vmem:[#allocation2 + $0x38] sm:$0xff] 0.0
      %48 = vst [vmem:[#allocation2 + $0x40] sm:$0xff] 0.0
      %49 = vst [vmem:[#allocation2 + $0x48] sm:$0xff] 0.0
      %50 = vst [vmem:[#allocation2 + $0x50] sm:$0xff] 0.0
      %51 = vst [vmem:[#allocation2 + $0x58] sm:$0xff] 0.0
      %52 = vst [vmem:[#allocation2 + $0x60] sm:$0xff] 0.0
      %53 = vst [vmem:[#allocation2 + $0x68] sm:$0xff] 0.0
      %54 = vst [vmem:[#allocation2 + $0x70] sm:$0xff] 0.0
      %55 = vst [vmem:[#allocation2 + $0x78] sm:$0xff] 0.0
      %56 = vst [vmem:[#allocation2 + $0x80] sm:$0xff] 0.0
      %57 = vst [vmem:[#allocation2 + $0x88] sm:$0xff] 0.0
      %58 = vst [vmem:[#allocation2 + $0x90] sm:$0xff] 0.0
      %59 = vst [vmem:[#allocation2 + $0x98] sm:$0xff] 0.0
    $region21: #{tpu_custom_call.1} parent=1 // pred_fallthru
      _
    %v60 = vld [vmem:[#allocation3] sm:$0xff]
    %v61 = vld [vmem:[#allocation3 + $0x8] sm:$0xff]
    %v62 = vld [vmem:[#allocation3 + $0x10] sm:$0xff]
    %v63 = vld [vmem:[#allocation3 + $0x18] sm:$0xff]
    %v64 = vld [vmem:[#allocation6] sm:$0xff]
    %v65 = vld [vmem:[#allocation6 + $0x8] sm:$0xff]
    %v66 = vld [vmem:[#allocation6 + $0x10] sm:$0xff]
    %v67 = vld [vmem:[#allocation6 + $0x18] sm:$0xff]
    %v68 = vlaneseq
    %v69 = vshrl.u32 %v68, 7
    %v70 = vlaneseq
    %v71 = vand.u32 %v70, 127
    %v72 = vadd.s32 %v71, 128
    %v73 = vadd.s32 %v71, 256
    %v74 = vadd.s32 %v71, 384
    %s75 = smul.u32 0, 8
    %v76 = vstv %s75
    %v77 = vadd.s32 %v76, %v69
    %v78 = vmul.u32 %v77, 512
    %v79 = vadd.s32 %v78, %v71
    %v80 = vadd.s32 %v78, %v72
    %v81 = vadd.s32 %v78, %v73
    %v82 = vadd.s32 %v78, %v74
    %vm83 = vcmp.lt.s32.totalorder %v79, 512
    %vm84 = vcmp.lt.s32.totalorder %v80, 512
    %vm85 = vcmp.lt.s32.totalorder %v81, 512
    %vm86 = vcmp.lt.s32.totalorder %v82, 512
    %v87 = vsel %vm83, 1, 0
    %v88 = vsel %vm84, 1, 0
    %v89 = vsel %vm85, 1, 0
    %v90 = vsel %vm86, 1, 0
    %v91 = vcvt.s32.f32 %v87
    %v92 = vcvt.s32.f32 %v88
    %v93 = vcvt.s32.f32 %v89
    %v94 = vcvt.s32.f32 %v90
    %v95 = vsub.f32 0.0, %v60
    %v96 = vsub.f32 0.0, %v61
    %v97 = vsub.f32 0.0, %v62
    %v98 = vsub.f32 0.0, %v63
    %v99 = vmul.f32 %v95, 1.442695
    %v100 = vpow.pop %v99
    %v101 = vmul.f32 %v96, 1.442695
    %v102 = vpow.pop %v101
    %v103 = vmul.f32 %v97, 1.442695
    %v104 = vpow.pop %v103
    %v105 = vmul.f32 %v98, 1.442695
    %v106 = vpow.pop %v105
    %v107 = vadd.f32 %v100, 1.0
    %v108 = vadd.f32 %v102, 1.0
    %v109 = vadd.f32 %v104, 1.0
    %v110 = vadd.f32 %v106, 1.0
    %v111 = vrcp.pop %v107
    %v112 = vmul.f32 1.0, %v111
    %v113 = vrcp.pop %v108
    %v114 = vmul.f32 1.0, %v113
    %v115 = vrcp.pop %v109
    %v116 = vmul.f32 1.0, %v115
    %v117 = vrcp.pop %v110
    %v118 = vmul.f32 1.0, %v117
    %v119 = vmax.f32 %v112, 0.0001
    %v120 = vmax.f32 %v114, 0.0001
    %v121 = vmax.f32 %v116, 0.0001
    %v122 = vmax.f32 %v118, 0.0001
    %v123 = vmin.f32 %v119, 0.9999
    %v124 = vmin.f32 %v120, 0.9999
    %v125 = vmin.f32 %v121, 0.9999
    %v126 = vmin.f32 %v122, 0.9999
    %v127 = vlog2.pop %v107
    %v128 = vmul.f32 %v127, 0.6931472
    %v129 = vlog2.pop %v108
    %v130 = vmul.f32 %v129, 0.6931472
    %v131 = vlog2.pop %v109
    %v132 = vmul.f32 %v131, 0.6931472
    %v133 = vlog2.pop %v110
    %v134 = vmul.f32 %v133, 0.6931472
    %vm135 = vcmp.lt.f32.partialorder %v112, 0.0001
    %vm136 = vcmp.lt.f32.partialorder %v114, 0.0001
    %vm137 = vcmp.lt.f32.partialorder %v116, 0.0001
    %vm138 = vcmp.lt.f32.partialorder %v118, 0.0001
    %vm139 = vcmp.gt.f32.partialorder %v112, 0.9999
    %vm140 = vcmp.gt.f32.partialorder %v114, 0.9999
    %vm141 = vcmp.gt.f32.partialorder %v116, 0.9999
    %vm142 = vcmp.gt.f32.partialorder %v118, 0.9999
    %v143 = vsub.f32 0.0, %v128
    %v144 = vsub.f32 0.0, %v130
    %v145 = vsub.f32 0.0, %v132
    %v146 = vsub.f32 0.0, %v134
    %v147 = vsel %vm139, -0.000100005, %v143
    %v148 = vsel %vm140, -0.000100005, %v144
    %v149 = vsel %vm141, -0.000100005, %v145
    %v150 = vsel %vm142, -0.000100005, %v146
    %v151 = vsel %vm135, -9.2103405, %v147
    %v152 = vsel %vm136, -9.2103405, %v148
    %v153 = vsel %vm137, -9.2103405, %v149
    %v154 = vsel %vm138, -9.2103405, %v150
    %v155 = vsub.f32 %v95, %v128
    %v156 = vsub.f32 %v96, %v130
    %v157 = vsub.f32 %v97, %v132
    %v158 = vsub.f32 %v98, %v134
    %v159 = vsel %vm139, -9.2103405, %v155
    %v160 = vsel %vm140, -9.2103405, %v156
    %v161 = vsel %vm141, -9.2103405, %v157
    %v162 = vsel %vm142, -9.2103405, %v158
    %v163 = vsel %vm135, -0.000100005, %v159
    %v164 = vsel %vm136, -0.000100005, %v160
    %v165 = vsel %vm137, -0.000100005, %v161
    %v166 = vsel %vm138, -0.000100005, %v162
    %vm167 = vcmp.eq.f32.partialorder %v64, 1.0
    %vm168 = vcmp.eq.f32.partialorder %v65, 1.0
    %vm169 = vcmp.eq.f32.partialorder %v66, 1.0
    %vm170 = vcmp.eq.f32.partialorder %v67, 1.0
    %v171 = vsel %vm167, 1, 0
    %v172 = vsel %vm168, 1, 0
    %v173 = vsel %vm169, 1, 0
    %v174 = vsel %vm170, 1, 0
    %v175 = vcvt.s32.f32 %v171
    %v176 = vcvt.s32.f32 %v172
    %v177 = vcvt.s32.f32 %v173
    %v178 = vcvt.s32.f32 %v174
    %v179 = vmul.f32 %v175, %v91
    %v180 = vmul.f32 %v176, %v92
    %v181 = vmul.f32 %v177, %v93
    %v182 = vmul.f32 %v178, %v94
    %vm183 = vcmp.lt.f32.partialorder %v64, 1.0
    %vm184 = vcmp.lt.f32.partialorder %v65, 1.0
    %vm185 = vcmp.lt.f32.partialorder %v66, 1.0
    %vm186 = vcmp.lt.f32.partialorder %v67, 1.0
    %v187 = vsel %vm183, 1, 0
    %v188 = vsel %vm184, 1, 0
    %v189 = vsel %vm185, 1, 0
    %v190 = vsel %vm186, 1, 0
    %v191 = vcvt.s32.f32 %v187
    %v192 = vcvt.s32.f32 %v188
    %v193 = vcvt.s32.f32 %v189
    %v194 = vcvt.s32.f32 %v190
    %v195 = vmul.f32 %v191, %v91
    %v196 = vmul.f32 %v192, %v92
    %v197 = vmul.f32 %v193, %v93
    %v198 = vmul.f32 %v194, %v94
    %v199 = vsub.f32 1.0, %v64
    %v200 = vsub.f32 1.0, %v65
    %v201 = vsub.f32 1.0, %v66
    %v202 = vsub.f32 1.0, %v67
    %v203 = vmul.f32 %v199, %v199
    %v204 = vmul.f32 %v200, %v200
    %v205 = vmul.f32 %v201, %v201
    %v206 = vmul.f32 %v202, %v202
    %v207 = vmul.f32 %v203, %v203
    %v208 = vmul.f32 %v204, %v204
    %v209 = vmul.f32 %v205, %v205
    %v210 = vmul.f32 %v206, %v206
    %v211 = vsub.f32 1.0, %v123
    %v212 = vsub.f32 1.0, %v124
    %v213 = vsub.f32 1.0, %v125
    %v214 = vsub.f32 1.0, %v126
    %v215 = vmul.f32 %v151, %v211
    %v216 = vmul.f32 %v152, %v212
    %v217 = vmul.f32 %v153, %v213
    %v218 = vmul.f32 %v154, %v214
    %v219 = vmul.f32 %v215, %v211
    %v220 = vmul.f32 %v216, %v212
    %v221 = vmul.f32 %v217, %v213
    %v222 = vmul.f32 %v218, %v214
    %v223 = vmul.f32 %v219, %v179
    %v224 = vmul.f32 %v220, %v180
    %v225 = vmul.f32 %v221, %v181
    %v226 = vmul.f32 %v222, %v182
    %v227 = vmul.f32 %v163, %v123
    %v228 = vmul.f32 %v164, %v124
    %v229 = vmul.f32 %v165, %v125
    %v230 = vmul.f32 %v166, %v126
    %v231 = vmul.f32 %v227, %v123
    %v232 = vmul.f32 %v228, %v124
    %v233 = vmul.f32 %v229, %v125
    %v234 = vmul.f32 %v230, %v126
    %v235 = vmul.f32 %v231, %v207
    %v236 = vmul.f32 %v232, %v208
    %v237 = vmul.f32 %v233, %v209
    %v238 = vmul.f32 %v234, %v210
    %v239 = vmul.f32 %v235, %v195
    %v240 = vmul.f32 %v236, %v196
    %v241 = vmul.f32 %v237, %v197
    %v242 = vmul.f32 %v238, %v198
    %vm243 = vcmp.gt.f32.partialorder %v64, 0.0
    %vm244 = vcmp.gt.f32.partialorder %v65, 0.0
    %vm245 = vcmp.gt.f32.partialorder %v66, 0.0
    %vm246 = vcmp.gt.f32.partialorder %v67, 0.0
    %v247 = vsel %vm243, 1, 0
    %v248 = vsel %vm244, 1, 0
    %v249 = vsel %vm245, 1, 0
    %v250 = vsel %vm246, 1, 0
    %v251 = vcvt.s32.f32 %v247
    %v252 = vcvt.s32.f32 %v248
    %v253 = vcvt.s32.f32 %v249
    %v254 = vcvt.s32.f32 %v250
    %v255 = vmul.f32 %v251, %v91
    %v256 = vmul.f32 %v252, %v92
    %v257 = vmul.f32 %v253, %v93
    %v258 = vmul.f32 %v254, %v94
    %v259 = vsub.f32 %v123, %v64
    %v260 = vsub.f32 %v124, %v65
    %v261 = vsub.f32 %v125, %v66
    %v262 = vsub.f32 %v126, %v67
    %v263 = vand.u32 2147483647, %v259
    %v264 = vand.u32 2147483647, %v260
    %v265 = vand.u32 2147483647, %v261
    %v266 = vand.u32 2147483647, %v262
    %v267 = vmul.f32 %v263, %v255
    %v268 = vmul.f32 %v264, %v256
    %v269 = vmul.f32 %v265, %v257
    %v270 = vmul.f32 %v266, %v258
    %v271 = vld [vmem:[#allocation2] sm:$0xff]
    %v272 = vld [vmem:[#allocation2 + $0x8] sm:$0xff]
    %v273 = vld [vmem:[#allocation2 + $0x10] sm:$0xff]
    %v274 = vld [vmem:[#allocation2 + $0x18] sm:$0xff]
    %v275 = vadd.f32 %v271, %v223
    %v276 = vadd.f32 %v272, %v224
    %v277 = vadd.f32 %v273, %v225
    %v278 = vadd.f32 %v274, %v226
    %279 = vst [vmem:[#allocation2] sm:$0xff] %v275
    %280 = vst [vmem:[#allocation2 + $0x8] sm:$0xff] %v276
    %281 = vst [vmem:[#allocation2 + $0x10] sm:$0xff] %v277
    %282 = vst [vmem:[#allocation2 + $0x18] sm:$0xff] %v278
    %s283 = scalar_lea.vmem [#allocation2], 32
    %v284 = vld [vmem:[%s283] sm:$0xff]
    %v285 = vld [vmem:[%s283 + $0x8] sm:$0xff]
    %v286 = vld [vmem:[%s283 + $0x10] sm:$0xff]
    %v287 = vld [vmem:[%s283 + $0x18] sm:$0xff]
    %v288 = vadd.f32 %v284, %v239
    %v289 = vadd.f32 %v285, %v240
    %v290 = vadd.f32 %v286, %v241
    %v291 = vadd.f32 %v287, %v242
    %292 = vst [vmem:[%s283] sm:$0xff] %v288
    %293 = vst [vmem:[%s283 + $0x8] sm:$0xff] %v289
    %294 = vst [vmem:[%s283 + $0x10] sm:$0xff] %v290
    %295 = vst [vmem:[%s283 + $0x18] sm:$0xff] %v291
    %s296 = scalar_lea.vmem [#allocation2], 64
    %v297 = vld [vmem:[%s296] sm:$0xff]
    %v298 = vld [vmem:[%s296 + $0x8] sm:$0xff]
    %v299 = vld [vmem:[%s296 + $0x10] sm:$0xff]
    %v300 = vld [vmem:[%s296 + $0x18] sm:$0xff]
    %v301 = vadd.f32 %v297, %v179
    %v302 = vadd.f32 %v298, %v180
    %v303 = vadd.f32 %v299, %v181
    %v304 = vadd.f32 %v300, %v182
    %305 = vst [vmem:[%s296] sm:$0xff] %v301
    %306 = vst [vmem:[%s296 + $0x8] sm:$0xff] %v302
    %307 = vst [vmem:[%s296 + $0x10] sm:$0xff] %v303
    %308 = vst [vmem:[%s296 + $0x18] sm:$0xff] %v304
    %s309 = scalar_lea.vmem [#allocation2], 96
    %v310 = vld [vmem:[%s309] sm:$0xff]
    %v311 = vld [vmem:[%s309 + $0x8] sm:$0xff]
    %v312 = vld [vmem:[%s309 + $0x10] sm:$0xff]
    %v313 = vld [vmem:[%s309 + $0x18] sm:$0xff]
    %v314 = vadd.f32 %v310, %v267
    %v315 = vadd.f32 %v311, %v268
    %v316 = vadd.f32 %v312, %v269
    %v317 = vadd.f32 %v313, %v270
    %318 = vst [vmem:[%s309] sm:$0xff] %v314
    %319 = vst [vmem:[%s309 + $0x8] sm:$0xff] %v315
    %320 = vst [vmem:[%s309 + $0x10] sm:$0xff] %v316
    %321 = vst [vmem:[%s309 + $0x18] sm:$0xff] %v317
    %s322 = scalar_lea.vmem [#allocation2], 128
    %v323 = vld [vmem:[%s322] sm:$0xff]
    %v324 = vld [vmem:[%s322 + $0x8] sm:$0xff]
    %v325 = vld [vmem:[%s322 + $0x10] sm:$0xff]
    %v326 = vld [vmem:[%s322 + $0x18] sm:$0xff]
    %v327 = vadd.f32 %v323, %v255
    %v328 = vadd.f32 %v324, %v256
    %v329 = vadd.f32 %v325, %v257
    %v330 = vadd.f32 %v326, %v258
    %331 = vst [vmem:[%s322] sm:$0xff] %v327
    %332 = vst [vmem:[%s322 + $0x8] sm:$0xff] %v328
    %333 = vst [vmem:[%s322 + $0x10] sm:$0xff] %v329
    %334 = vst [vmem:[%s322 + $0x18] sm:$0xff] %v330
    // Predicated region
    $region22: #{tpu_custom_call.1} parent=1 // pred_check
      %p335 = pneg %p36
    $region23: #{tpu_custom_call.1} parent=1 // pred_check_branch
      %337 = sbr.rel (%p335) target = $region25
    $region24: #{tpu_custom_call.1} parent=1 // pred_region
      %v338 = vld [vmem:[#allocation2] sm:$0xff]
      %v339 = vld [vmem:[#allocation2 + $0x8] sm:$0xff]
      %v340 = vld [vmem:[#allocation2 + $0x10] sm:$0xff]
      %v341 = vld [vmem:[#allocation2 + $0x18] sm:$0xff]
      %v342 = vadd.f32 %v338, %v339
      %v343 = vadd.f32 %v342, %v340
      %v344 = vadd.f32 %v343, %v341
      %345 = vadd.xlane.f32.xlu0 %v344
      %v346 = vpop.xlane.xlu0 %345
      %v347 = vrot.slane %v346, 4
      %v348 = vadd.f32 %v346, %v347
      %v349 = vrot.slane %v348, 2
      %v350 = vadd.f32 %v348, %v349
      %v351 = vrot.slane %v350, 1
      %v352 = vadd.f32 %v350, %v351
      %s353 = vtos %v352
      %s354 = scalar_lea.smem [#allocation8], 0
      %355 = sst [smem:[%s354]] %s353
      %v356 = vld [vmem:[%s283] sm:$0xff]
      %v357 = vld [vmem:[%s283 + $0x8] sm:$0xff]
      %v358 = vld [vmem:[%s283 + $0x10] sm:$0xff]
      %v359 = vld [vmem:[%s283 + $0x18] sm:$0xff]
      %v360 = vadd.f32 %v356, %v357
      %v361 = vadd.f32 %v360, %v358
      %v362 = vadd.f32 %v361, %v359
      %363 = vadd.xlane.f32.xlu0 %v362
      %v364 = vpop.xlane.xlu0 %363
      %v365 = vrot.slane %v364, 4
      %v366 = vadd.f32 %v364, %v365
      %v367 = vrot.slane %v366, 2
      %v368 = vadd.f32 %v366, %v367
      %v369 = vrot.slane %v368, 1
      %v370 = vadd.f32 %v368, %v369
      %s371 = vtos %v370
      %s372 = scalar_lea.smem [#allocation8], 1
      %373 = sst [smem:[%s372]] %s371
      %v374 = vld [vmem:[%s296] sm:$0xff]
      %v375 = vld [vmem:[%s296 + $0x8] sm:$0xff]
      %v376 = vld [vmem:[%s296 + $0x10] sm:$0xff]
      %v377 = vld [vmem:[%s296 + $0x18] sm:$0xff]
      %v378 = vadd.f32 %v374, %v375
      %v379 = vadd.f32 %v378, %v376
      %v380 = vadd.f32 %v379, %v377
      %381 = vadd.xlane.f32.xlu0 %v380
      %v382 = vpop.xlane.xlu0 %381
      %v383 = vrot.slane %v382, 4
      %v384 = vadd.f32 %v382, %v383
      %v385 = vrot.slane %v384, 2
      %v386 = vadd.f32 %v384, %v385
      %v387 = vrot.slane %v386, 1
      %v388 = vadd.f32 %v386, %v387
      %s389 = vtos %v388
      %s390 = scalar_lea.smem [#allocation8], 2
      %391 = sst [smem:[%s390]] %s389
      %v392 = vld [vmem:[%s309] sm:$0xff]
      %v393 = vld [vmem:[%s309 + $0x8] sm:$0xff]
      %v394 = vld [vmem:[%s309 + $0x10] sm:$0xff]
      %v395 = vld [vmem:[%s309 + $0x18] sm:$0xff]
      %v396 = vadd.f32 %v392, %v393
      %v397 = vadd.f32 %v396, %v394
      %v398 = vadd.f32 %v397, %v395
      %399 = vadd.xlane.f32.xlu0 %v398
      %v400 = vpop.xlane.xlu0 %399
      %v401 = vrot.slane %v400, 4
      %v402 = vadd.f32 %v400, %v401
      %v403 = vrot.slane %v402, 2
      %v404 = vadd.f32 %v402, %v403
      %v405 = vrot.slane %v404, 1
      %v406 = vadd.f32 %v404, %v405
      %s407 = vtos %v406
      %s408 = scalar_lea.smem [#allocation8], 3
      %409 = sst [smem:[%s408]] %s407
      %v410 = vld [vmem:[%s322] sm:$0xff]
      %v411 = vld [vmem:[%s322 + $0x8] sm:$0xff]
      %v412 = vld [vmem:[%s322 + $0x10] sm:$0xff]
      %v413 = vld [vmem:[%s322 + $0x18] sm:$0xff]
      %v414 = vadd.f32 %v410, %v411
      %v415 = vadd.f32 %v414, %v412
      %v416 = vadd.f32 %v415, %v413
      %417 = vadd.xlane.f32.xlu0 %v416
      %v418 = vpop.xlane.xlu0 %417
      %v419 = vrot.slane %v418, 4
      %v420 = vadd.f32 %v418, %v419
      %v421 = vrot.slane %v420, 2
      %v422 = vadd.f32 %v420, %v421
      %v423 = vrot.slane %v422, 1
      %v424 = vadd.f32 %v422, %v423
      %s425 = vtos %v424
      %s426 = scalar_lea.smem [#allocation8], 4
      %427 = sst [smem:[%s426]] %s425
    $region25: #{tpu_custom_call.1} parent=1 // pred_fallthru
      _
    // Predicated region
    $region26: #{tpu_custom_call.1} parent=1 // pred_check
      _
    $region27: #{tpu_custom_call.1} parent=1 // pred_check_branch
      %429 = sbr.rel (0) target = $region29
    $region28: #{tpu_custom_call.1} parent=1 // pred_region
      %s431 = ssub.s32 16, 16
      %432 = vsyncadd [#allocation5], %s431
      %435 = dma.smem_to_hbm [#allocation8], 16, %s2, [#allocation5]
    $region29: #{tpu_custom_call.1} parent=1 // pred_fallthru
      _
    // Predicated region
    $region30: #{tpu_custom_call.1} parent=1 // pred_check
      _
    $region31: #{tpu_custom_call.1} parent=1 // pred_check_branch
      %437 = sbr.rel (0) target = $region33
    $region32: #{tpu_custom_call.1} parent=1 // pred_region
      %438 = dma.done [#allocation5], 16
    $region33: #{tpu_custom_call.1} parent=1 // pred_fallthru
      _
    %439 = sfence
    %440 = vsyncpa [#allocation4], 1
    %441 = vsyncpa [#allocation7], 1
    %442 = vsyncpa [#allocation5], 1

</llo_original>
